<compile_context>
chip_gen: v7x
topology: tpu7x:2x2x1
jax: 0.10.0
libtpu: 0.0.40
codegen_flags: <defaults>
</compile_context>

<pallas_src>
import math

import jax
import jax.numpy as jnp
from jax.experimental import pallas as pl
from jax.experimental.pallas import tpu as pltpu

_LANE = 128                       # TPU vreg lane width
_TARGET_ROWS = 8192               # bt*rt rows of 128 f32 = ~4 MiB per x/out block
_VMEM_LIMIT = 48 * 1024 * 1024    # safe on v7x (64 MiB physical) and v5e/v6e (128 MiB)


def _build_pe(d_model: int, max_len: int = 500, dtype=jnp.float32) -> jnp.ndarray:
    """Sinusoidal positional-encoding table, shape (1, max_len, d_model)."""
    position = jnp.arange(max_len, dtype=jnp.float32)[:, None]               # (max_len, 1)
    div_term = jnp.exp(
        jnp.arange(0, d_model, 2, dtype=jnp.float32) * (-math.log(10000.0) / d_model)
    )                                                                         # (ceil(d/2),)
    angles = position * div_term                                              # (max_len, ceil(d/2))
    pe = jnp.zeros((max_len, d_model), dtype=jnp.float32)
    pe = pe.at[:, 0::2].set(jnp.sin(angles))
    pe = pe.at[:, 1::2].set(jnp.cos(angles[:, : d_model // 2]))               # robust for odd d_model
    return pe[None].astype(dtype)                                             # (1, max_len, d_model)


def _add_kernel(x_ref, pe_ref, o_ref):
    # Pure element-wise add; pe block is (1, rt, 128) and broadcasts over the
    # leading batch-tile dim.  VALU has huge slack, the kernel is HBM-bound.
    o_ref[...] = x_ref[...] + pe_ref[...]


def _choose_row_tile(R: int) -> int:
    """Row tile along the flattened (S*D/128) axis."""
    if R <= _TARGET_ROWS:
        return R                                  # full dim -> always a legal block
    # Largest multiple of 8 <= _TARGET_ROWS that divides R: no ragged tail,
    # no padded DMA, no masked stores on the last tile.
    start = _TARGET_ROWS - (_TARGET_ROWS % 8)
    for cand in range(start, 7, -8):
        if R % cand == 0:
            return cand
    # No divisor found (R not a multiple of 8): accept a ragged tail; Pallas
    # masks the out-of-bounds part of the final block.
    return _TARGET_ROWS


def _choose_batch_tile(B: int, rt: int) -> int:
    """Batch tile so bt*rt ~= _TARGET_ROWS (restores multi-MiB blocks when R is small)."""
    bt = max(1, min(B, _TARGET_ROWS // max(rt, 1)))
    while B % bt != 0:                            # keep the batch grid exact
        bt -= 1
    return bt


def _pos_enc_flat(xf: jnp.ndarray, pf: jnp.ndarray, donate_x: bool) -> jnp.ndarray:
    """Lane-dense add: xf (B, R, 128) + pf (1, R, 128)."""
    B, R, _ = xf.shape
    rt = _choose_row_tile(R)
    bt = _choose_batch_tile(B, rt)
    nt = pl.cdiv(R, rt)
    nb = pl.cdiv(B, bt)

    itemsize = jnp.dtype(xf.dtype).itemsize
    cost = pl.CostEstimate(
        flops=B * R * _LANE,
        transcendentals=0,
        # x read + out write per element; pe read once per tile (amortised over B).
        bytes_accessed=(2 * B * R * _LANE + R * _LANE) * itemsize,
    )

    return pl.pallas_call(
        _add_kernel,
        out_shape=jax.ShapeDtypeStruct((B, R, _LANE), xf.dtype),
        # tile index outer, batch inner -> pe block index is unchanged across
        # consecutive steps, so Pallas skips re-DMAing the pe tile.
        grid=(nt, nb),
        in_specs=[
            pl.BlockSpec((bt, rt, _LANE), lambda t, b: (b, t, 0)),   # x
            pl.BlockSpec((1, rt, _LANE), lambda t, b: (0, t, 0)),    # pe (batch-broadcast)
        ],
        out_specs=pl.BlockSpec((bt, rt, _LANE), lambda t, b: (b, t, 0)),
        compiler_params=pltpu.CompilerParams(
            dimension_semantics=("parallel", "parallel"),  # lets v7x use both TCs
            vmem_limit_bytes=_VMEM_LIMIT,
        ),
        cost_estimate=cost,
        input_output_aliases=({0: 0} if donate_x else {}),
    )(xf, pf)


def positional_encoding(x: jnp.ndarray, pe: jnp.ndarray, *, donate_x: bool = False) -> jnp.ndarray:
    """x: (B, S, D); pe: (1, max_len, D).  Returns x + pe[:, :S] (broadcast over batch)."""
    B, S, D = x.shape
    max_len = pe.shape[1]
    if S > max_len:
        raise ValueError(f"sequence length {S} exceeds positional-encoding max_len {max_len}")
    if pe.shape[2] != D:
        raise ValueError(f"d_model mismatch: x has {D}, pe has {pe.shape[2]}")

    # pe is cast to x.dtype so a bf16 model stays bf16 end-to-end (halves HBM bytes).
    # PyTorch would promote bf16 x + f32 pe to f32; the difference is negligible for PE.
    pe_slice = pe[:, :S, :].astype(x.dtype)

    # Always take the lane-dense path: flatten each batch row to length S*D and,
    # if S*D is not a multiple of 128, zero-pad to the next multiple (padding the
    # small pe slice and x's flat view is far cheaper than masked 25%-lane stores).
    SD = S * D
    pad = (-SD) % _LANE
    xf = x.reshape(B, SD)
    pf = pe_slice.reshape(1, SD)
    if pad:
        xf = jnp.pad(xf, ((0, 0), (0, pad)))
        pf = jnp.pad(pf, ((0, 0), (0, pad)))
    Rp = (SD + pad) // _LANE

    out = _pos_enc_flat(xf.reshape(B, Rp, _LANE), pf.reshape(1, Rp, _LANE), donate_x)

    if pad:
        out = out.reshape(B, Rp * _LANE)[:, :SD]
    return out.reshape(B, S, D)


if __name__ == "__main__":
    B, S, D = 2, 8, 32
    MAX_LEN = 500

    key = jax.random.PRNGKey(0)
    x = jax.random.normal(key, (B, S, D), dtype=jnp.float32)

    pe = _build_pe(D, MAX_LEN, dtype=jnp.float32)

    out = positional_encoding(x, pe)
    out = jax.block_until_ready(out)

    # sanity check against the plain-JAX reference
    ref = x + pe[:, :S]
    assert out.shape == (B, S, D)
    assert jnp.allclose(out, ref, atol=1e-6), "mismatch vs reference"

    print("KERNEL_OK")
</pallas_src>

<mosaic_0001>
module attributes {stable_mosaic.version = 11 : i64} {
  func.func @_add_kernel(%arg0: i32, %arg1: i32, %arg2: memref<2x2x128xf32, #tpu.memory_space<vmem>>, %arg3: memref<1x2x128xf32, #tpu.memory_space<vmem>>, %arg4: memref<2x2x128xf32, #tpu.memory_space<vmem>>) attributes {dimension_semantics = [#tpu.dimension_semantics<parallel>, #tpu.dimension_semantics<parallel>], iteration_bounds = array<i64: 1, 1>, scalar_prefetch = 0 : i64, scratch_operands = 0 : i64, tpu.core_type = #tpu.core_type<tc>, window_params = [{transform_indices = @transform_0, window_bounds = array<i64: 2, 2, 128>}, {transform_indices = @transform_1, window_bounds = array<i64: 1, 2, 128>}, {transform_indices = @transform_2, window_bounds = array<i64: 2, 2, 128>}]} {
    %c0 = arith.constant 0 : index
    %c0_0 = arith.constant 0 : index
    %c0_1 = arith.constant 0 : index
    %0 = vector.load %arg2[%c0, %c0_0, %c0_1] : memref<2x2x128xf32, #tpu.memory_space<vmem>>, vector<2x2x128xf32>
    %c0_2 = arith.constant 0 : index
    %c0_3 = arith.constant 0 : index
    %c0_4 = arith.constant 0 : index
    %1 = vector.load %arg3[%c0_2, %c0_3, %c0_4] : memref<1x2x128xf32, #tpu.memory_space<vmem>>, vector<1x2x128xf32>
    %2 = vector.broadcast %1 : vector<1x2x128xf32> to vector<2x2x128xf32>
    %3 = arith.addf %0, %2 : vector<2x2x128xf32>
    %c0_5 = arith.constant 0 : index
    %c0_6 = arith.constant 0 : index
    %c0_7 = arith.constant 0 : index
    %4 = vector.load %arg4[%c0_5, %c0_6, %c0_7] : memref<2x2x128xf32, #tpu.memory_space<vmem>>, vector<2x2x128xf32>
    tpu.vector_store %arg4[%c0_5, %c0_6, %c0_7], %3 {strides = array<i32>} : memref<2x2x128xf32, #tpu.memory_space<vmem>>, vector<2x2x128xf32>,
    return
  }
  func.func @transform_0(%arg0: i32, %arg1: i32) -> (i32, i32, i32) {
    %c0_i32 = arith.constant 0 : i32
    %c0_i32_0 = arith.constant 0 : i32
    return %arg1, %arg0, %c0_i32 : i32, i32, i32
  }
  func.func @transform_1(%arg0: i32, %arg1: i32) -> (i32, i32, i32) {
    %c0_i32 = arith.constant 0 : i32
    %c0_i32_0 = arith.constant 0 : i32
    %c0_i32_1 = arith.constant 0 : i32
    return %c0_i32, %arg0, %c0_i32_0 : i32, i32, i32
  }
  func.func @transform_2(%arg0: i32, %arg1: i32) -> (i32, i32, i32) {
    %c0_i32 = arith.constant 0 : i32
    %c0_i32_0 = arith.constant 0 : i32
    return %arg1, %arg0, %c0_i32 : i32, i32, i32
  }
}

</mosaic_0001>

<llo_original>
// kernel: tpu_custom_call.1
$region0: #{tpu_custom_call.1}
  #allocation0 [shape = 'u32[]', space=smem, size = 0x4, offset = 0x4, fixed_abs, tag = 'smem constant byte address 0x4 - core index']
  #allocation1 [shape = 'u32[144,128]{1,0:T(1,128)}', space=vmem, size = 0x12000, scoped, tag = 'internal scratch']
  %s0 = inlined_call_operand.hbm [shape: f32[2,2,128], index: 0, kind: input, shape index: {}]
  %s1 = inlined_call_operand.vmem [shape: f32[1,2,128], index: 1, kind: input, shape index: {}]
  %s2 = inlined_call_operand.hbm [shape: f32[2,2,128], index: 2, kind: output, shape index: {}]
  %s3 = sld [smem:[#allocation0]]
  $region22: #{tpu_custom_call.1} parent=0
    _
  %s5 = ssub.s32 1, %s3
  %s6 = scalar_select 0, %s5, %s3
  $region1: #{tpu_custom_call.1} parent=0
    #allocation2 [shape = 'u8[2048]{0}', space=vmem, size = 0x800, scoped, tag = 'input window, operand 0, single buffered']
    #allocation3 [shape = 's32[1]{0}', space=sflag, size = 0x4, scoped, tag = 'scoped memory for tpu_custom_call.1']
    #allocation4 [shape = 's32[1]{0}', space=sflag, size = 0x4, scoped, tag = 'scoped memory for tpu_custom_call.1']
    #allocation5 [shape = 'u8[2048]{0}', space=vmem, size = 0x800, scoped, tag = 'output window, operand 0, single buffered']
    %7 = vsyncpa [#allocation3], 0
    %8 = vsyncpa [#allocation4], 0
    // Predicated region
    $region2: #{tpu_custom_call.1} parent=1 // pred_check
      _
    $region3: #{tpu_custom_call.1} parent=1 // pred_check_branch
      %10 = sbr.rel (0) target = $region5
    $region4: #{tpu_custom_call.1} parent=1 // pred_region
      %s12 = ssub.s32 64, 64
      %13 = vsyncadd [#allocation3], %s12
      %s14 = sshll.u32 [#allocation2], 4
      %s15 = int_to_ptr.vmem [resolvable:$true] %s14
      %20 = dma.hbm_to_vmem [thread:$0]  %s0, 64, %s15, [#allocation3], 32, 32, 2
    $region5: #{tpu_custom_call.1} parent=1 // pred_fallthru
      _
    // Predicated region
    $region6: #{tpu_custom_call.1} parent=1 // pred_check
      _
    $region7: #{tpu_custom_call.1} parent=1 // pred_check_branch
      %22 = sbr.rel (0) target = $region9
    $region8: #{tpu_custom_call.1} parent=1 // pred_region
      _
    $region9: #{tpu_custom_call.1} parent=1 // pred_fallthru
      _
    // Predicated region
    $region10: #{tpu_custom_call.1} parent=1 // pred_check
      _
    $region11: #{tpu_custom_call.1} parent=1 // pred_check_branch
      %24 = sbr.rel (0) target = $region13
    $region12: #{tpu_custom_call.1} parent=1 // pred_region
      %25 = dma.done [#allocation3], 64
    $region13: #{tpu_custom_call.1} parent=1 // pred_fallthru
      _
    %v26 = vld [vmem:[#allocation2] sm:$0x3]
    %v27 = vld [vmem:[#allocation2 + $0x2] sm:$0x3]
    %v28 = vld [vmem:[%s1] sm:$0x3]
    %v29 = vadd.f32 %v26, %v28
    %v30 = vadd.f32 %v27, %v28
    %31 = vst [vmem:[#allocation5] sm:$0x3] %v29
    %32 = vst [vmem:[#allocation5 + $0x2] sm:$0x3] %v30
    // Predicated region
    $region14: #{tpu_custom_call.1} parent=1 // pred_check
      _
    $region15: #{tpu_custom_call.1} parent=1 // pred_check_branch
      %34 = sbr.rel (0) target = $region17
    $region16: #{tpu_custom_call.1} parent=1 // pred_region
      %s36 = ssub.s32 64, 64
      %37 = vsyncadd [#allocation4], %s36
      %s38 = sshll.u32 [#allocation5], 4
      %s39 = int_to_ptr.vmem [resolvable:$true] %s38
      %44 = dma.vmem_to_hbm [thread:$0]  %s39, 64, %s2, [#allocation4], 32, 32, 2
    $region17: #{tpu_custom_call.1} parent=1 // pred_fallthru
      _
    // Predicated region
    $region18: #{tpu_custom_call.1} parent=1 // pred_check
      _
    $region19: #{tpu_custom_call.1} parent=1 // pred_check_branch
      %46 = sbr.rel (0) target = $region21
    $region20: #{tpu_custom_call.1} parent=1 // pred_region
      %47 = dma.done [#allocation4], 64
    $region21: #{tpu_custom_call.1} parent=1 // pred_fallthru
      _
    %48 = vsyncpa [#allocation3], 1
    %49 = vsyncpa [#allocation4], 1

</llo_original>
